<compile_context>
chip_gen: v5e
topology: v5e:2x2
jax: 0.10.0
libtpu: 0.0.40
codegen_flags: <defaults>
</compile_context>

<pallas_src>
import functools

import jax
import jax.numpy as jnp
from jax.experimental import pallas as pl
from jax.experimental.pallas import tpu as pltpu

EPS = 1e-5


# ----------------------------- Pallas kernel bodies -----------------------------

def _channel_stats_kernel(x_ref, stats_ref):
    # x_ref:     (nb, C, S) f32   one block of images
    # stats_ref: (C, 2)     f32   accumulated [sum, sumsq] over the whole grid
    @pl.when(pl.program_id(0) == 0)
    def _():
        stats_ref[...] = jnp.zeros_like(stats_ref)

    c = x_ref.shape[1]
    acc_s = jnp.zeros((c, 1), jnp.float32)
    acc_q = jnp.zeros((c, 1), jnp.float32)
    for i in range(x_ref.shape[0]):            # static unroll, nb is small
        xi = x_ref[i]
        acc_s = acc_s + jnp.sum(xi, axis=1, keepdims=True)
        acc_q = acc_q + jnp.sum(xi * xi, axis=1, keepdims=True)
    stats_ref[...] += jnp.concatenate([acc_s, acc_q], axis=1)


def _bn_relu_conv1x1_kernel(x_ref, scale_ref, shift_ref, w_ref, y_ref, stats_ref):
    # x_ref:       (nb, Cin, S)  f32
    # scale/shift: (Cin, 1)      f32   fused BN1 (batch stats already folded in)
    # w_ref:       (Cmid, Cin)   bf16  torch (out, in) weight
    # y_ref:       (nb, Cmid, S) bf16  lane-dense intermediate (halved HBM traffic)
    # stats_ref:   (Cmid, 2)     f32   accumulated [sum(y), sum(y*y)] for BN2
    @pl.when(pl.program_id(0) == 0)
    def _():
        stats_ref[...] = jnp.zeros_like(stats_ref)

    cmid = w_ref.shape[0]
    acc_s = jnp.zeros((cmid, 1), jnp.float32)
    acc_q = jnp.zeros((cmid, 1), jnp.float32)
    for i in range(x_ref.shape[0]):            # static unroll over images in block
        a = jnp.maximum(x_ref[i] * scale_ref[...] + shift_ref[...], 0.0)   # f32
        # TODO(synk): for very small Cin (<=16) an unrolled VPU multiply-add over
        # the Cin rows avoids MXU fill/drain latency; MXU path kept for generality.
        y = jnp.dot(w_ref[...], a.astype(jnp.bfloat16),
                    preferred_element_type=jnp.float32)                    # (Cmid, S)
        y_ref[i] = y.astype(y_ref.dtype)
        acc_s = acc_s + jnp.sum(y, axis=1, keepdims=True)
        acc_q = acc_q + jnp.sum(y * y, axis=1, keepdims=True)
    stats_ref[...] += jnp.concatenate([acc_s, acc_q], axis=1)


def _bn_relu_conv3x3_concat_kernel(x_ref, y_ref, scale_ref, shift_ref, w_ref,
                                   mask_ref, o_ref, *, W):
    # x_ref:       (nb, Cin, S)        f32   shortcut channels (copied through)
    # y_ref:       (nb, Cmid, S)       bf16
    # scale/shift: (Cmid, 1)           f32   fused BN2
    # w_ref:       (3, Cout, 3*Cmid)   bf16  taps grouped by kh, (kw, ci) inside
    # mask_ref:    (9, 1, S)           bf16  precomputed zero-padding masks
    # o_ref:       (nb, Cin+Cout, S)   f32   final concat slab block
    S = y_ref.shape[2]
    for i in range(x_ref.shape[0]):            # static unroll over images in block
        a = jnp.maximum(y_ref[i].astype(jnp.float32) * scale_ref[...]
                        + shift_ref[...], 0.0)
        a = a.astype(jnp.bfloat16)             # bf16 taps: half the VMEM/vst traffic

        z = None
        for g, dh in enumerate((-1, 0, 1)):    # 3 accumulated dots of K = 3*Cmid
            taps = []
            for j, dw in enumerate((-1, 0, 1)):
                off = dh * W + dw
                tap = a if off == 0 else pltpu.roll(a, shift=(-off) % S, axis=1)
                if not (dh == 0 and dw == 0):
                    tap = tap * mask_ref[3 * g + j]      # (1, S) bf16 boundary mask
                taps.append(tap)
            pg = jnp.concatenate(taps, axis=0)           # (3*Cmid, S) bf16
            zg = jnp.dot(w_ref[g], pg, preferred_element_type=jnp.float32)
            z = zg if z is None else z + zg              # (Cout, S) f32

        # Write shortcut + residual channels as one lane-dense block store.
        o_ref[i] = jnp.concatenate([x_ref[i], z], axis=0).astype(o_ref.dtype)


# ------------------------------ pallas_call wrappers -----------------------------

def _compiler_params(semantics, double_buffered_block_bytes):
    # Size the scoped VMEM limit from the actual (double-buffered) block set,
    # leaving margin for weights / masks / in-register patches. Capped at 64 MiB
    # so the request is valid on every generation (v7x physical VMEM).
    need = double_buffered_block_bytes + (4 << 20)
    limit = int(min(max(need, 32 << 20), 64 << 20))
    return pltpu.CompilerParams(dimension_semantics=semantics,
                                vmem_limit_bytes=limit)


def _pick_images_per_step(N, Cin, Cmid, Cout, S):
    # Largest divisor of N whose double-buffered per-step blocks (kernel 2 is the
    # heaviest) stay within a small VMEM budget; amortizes per-step overhead at
    # small N while keeping blocks bounded at large N.
    per_image = 2 * S * (Cin * 4 + Cmid * 2 + (Cin + Cout) * 4)
    budget = 8 << 20
    nb = 1
    for cand in range(1, N + 1):
        if N % cand == 0 and cand * per_image <= budget:
            nb = cand
    return nb


def _channel_stats(x3, nb):
    N, C, S = x3.shape
    blk = nb * C * S * 4
    return pl.pallas_call(
        _channel_stats_kernel,
        out_shape=jax.ShapeDtypeStruct((C, 2), jnp.float32),
        grid_spec=pltpu.PrefetchScalarGridSpec(
            num_scalar_prefetch=0,
            grid=(N // nb,),
            in_specs=[pl.BlockSpec((nb, C, S), lambda n: (n, 0, 0))],
            out_specs=pl.BlockSpec((C, 2), lambda n: (0, 0)),
        ),
        compiler_params=_compiler_params(("arbitrary",), 2 * blk),
    )(x3)


def _conv1x1(x3, scale1, shift1, w1m, nb):
    N, Cin, S = x3.shape
    Cmid = w1m.shape[0]
    blk = nb * S * (Cin * 4 + Cmid * 2)
    return pl.pallas_call(
        _bn_relu_conv1x1_kernel,
        out_shape=(
            jax.ShapeDtypeStruct((N, Cmid, S), jnp.bfloat16),
            jax.ShapeDtypeStruct((Cmid, 2), jnp.float32),
        ),
        grid_spec=pltpu.PrefetchScalarGridSpec(
            num_scalar_prefetch=0,
            grid=(N // nb,),
            in_specs=[
                pl.BlockSpec((nb, Cin, S), lambda n: (n, 0, 0)),
                pl.BlockSpec((Cin, 1), lambda n: (0, 0)),
                pl.BlockSpec((Cin, 1), lambda n: (0, 0)),
                pl.BlockSpec((Cmid, Cin), lambda n: (0, 0)),
            ],
            out_specs=[
                pl.BlockSpec((nb, Cmid, S), lambda n: (n, 0, 0)),
                pl.BlockSpec((Cmid, 2), lambda n: (0, 0)),   # resident accumulator
            ],
        ),
        compiler_params=_compiler_params(("arbitrary",), 2 * blk),
    )(x3, scale1, shift1, w1m)


def _conv3x3_concat(x3, y3, scale2, shift2, w2g, mask, W, Cout, nb):
    N, Cin, S = x3.shape
    Cmid = y3.shape[1]
    blk = nb * S * (Cin * 4 + Cmid * 2 + (Cin + Cout) * 4)
    return pl.pallas_call(
        functools.partial(_bn_relu_conv3x3_concat_kernel, W=W),
        out_shape=jax.ShapeDtypeStruct((N, Cin + Cout, S), jnp.float32),
        grid_spec=pltpu.PrefetchScalarGridSpec(
            num_scalar_prefetch=0,
            grid=(N // nb,),
            in_specs=[
                pl.BlockSpec((nb, Cin, S), lambda n: (n, 0, 0)),
                pl.BlockSpec((nb, Cmid, S), lambda n: (n, 0, 0)),
                pl.BlockSpec((Cmid, 1), lambda n: (0, 0)),
                pl.BlockSpec((Cmid, 1), lambda n: (0, 0)),
                pl.BlockSpec((3, Cout, 3 * Cmid), lambda n: (0, 0, 0)),
                pl.BlockSpec((9, 1, S), lambda n: (0, 0, 0)),
            ],
            out_specs=pl.BlockSpec((nb, Cin + Cout, S), lambda n: (n, 0, 0)),
        ),
        compiler_params=_compiler_params(("parallel",), 2 * blk),
    )(x3, y3, scale2, shift2, w2g, mask)


# ---------------------------------- forward pass ---------------------------------

def _make_tap_masks(H, W):
    # Zero-padding validity masks for the 9 conv taps, one (1, S) row per tap.
    # Depend only on (H, W) -> computed once, kept VMEM-resident by the kernel.
    S = H * W
    col = jnp.arange(S, dtype=jnp.int32)
    hh, ww = col // W, col % W
    rows = []
    for dh in (-1, 0, 1):
        for dw in (-1, 0, 1):
            valid = ((hh + dh >= 0) & (hh + dh < H) &
                     (ww + dw >= 0) & (ww + dw < W))
            rows.append(valid)
    return jnp.stack(rows).astype(jnp.bfloat16).reshape(9, 1, S)


def bottleneck_forward(x_nchw, params):
    g1, b1, w1, g2, b2, w2 = params
    N, Cin, H, W = x_nchw.shape
    S = H * W
    Cmid = w1.shape[0]                     # torch weight (Cmid, Cin, 1, 1)
    Cout = w2.shape[0]                     # torch weight (Cout, Cmid, 3, 3)
    count = N * S

    x3 = x_nchw.astype(jnp.float32).reshape(N, Cin, S)   # free reshape of NCHW
    nb = _pick_images_per_step(N, Cin, Cmid, Cout, S)

    # BN1 batch statistics (training-mode, biased var): one fused HBM pass over x.
    # NOTE: E[x^2]-E[x]^2 in f32 is plenty accurate at these scales; switch to a
    # mean-centered two-pass combine if |mean| >> std ever matters.
    stats1 = _channel_stats(x3, nb)
    mean1 = stats1[:, 0] / count
    var1 = jnp.maximum(stats1[:, 1] / count - mean1 * mean1, 0.0)
    s1 = g1 / jnp.sqrt(var1 + EPS)
    scale1 = s1.reshape(Cin, 1)
    shift1 = (b1 - mean1 * s1).reshape(Cin, 1)

    w1m = w1[:, :, 0, 0].astype(jnp.bfloat16)             # (Cmid, Cin)

    # Fused BN1 + ReLU + 1x1 conv, plus BN2 partial sums (no extra pass over y).
    y3, stats2 = _conv1x1(x3, scale1, shift1, w1m, nb)     # y3 is bf16

    mean2 = stats2[:, 0] / count
    var2 = jnp.maximum(stats2[:, 1] / count - mean2 * mean2, 0.0)
    s2 = g2 / jnp.sqrt(var2 + EPS)
    scale2 = s2.reshape(Cmid, 1)
    shift2 = (b2 - mean2 * s2).reshape(Cmid, 1)

    # torch OIHW -> (kh, Cout, kw*Cmid) bf16: taps grouped by dh for 3 dots.
    w2g = jnp.transpose(w2, (2, 0, 3, 1)).reshape(3, Cout, 3 * Cmid)
    w2g = w2g.astype(jnp.bfloat16)

    mask = _make_tap_masks(H, W)

    # Fused BN2 + ReLU + 3x3 conv, writing directly into the concat slab
    # (x channels copied through) -> no trailing jnp.concatenate.
    out3 = _conv3x3_concat(x3, y3, scale2, shift2, w2g, mask, W, Cout, nb)
    return out3.reshape(N, Cin + Cout, H, W)


# -------------------------------- pure-JAX reference ------------------------------

def _reference(x, params):
    g1, b1, w1, g2, b2, w2 = params

    def bn_relu(t, g, b):
        m = t.mean(axis=(0, 2, 3), keepdims=True)
        v = t.var(axis=(0, 2, 3), keepdims=True)
        return jnp.maximum(
            (t - m) / jnp.sqrt(v + EPS) * g.reshape(1, -1, 1, 1)
            + b.reshape(1, -1, 1, 1),
            0.0,
        )

    a1 = bn_relu(x, g1, b1)
    y = jax.lax.conv_general_dilated(
        a1, w1, (1, 1), "VALID", dimension_numbers=("NCHW", "OIHW", "NCHW"))
    a2 = bn_relu(y, g2, b2)
    z = jax.lax.conv_general_dilated(
        a2, w2, (1, 1), ((1, 1), (1, 1)),
        dimension_numbers=("NCHW", "OIHW", "NCHW"))
    return jnp.concatenate([x, z], axis=1)


# -------------------------------------- main --------------------------------------

if __name__ == "__main__":
    key = jax.random.PRNGKey(0)
    N, Cin, H, W = 2, 4, 16, 16
    growth_rate = 8
    Cmid = 4 * growth_rate

    k = jax.random.split(key, 7)
    x = jax.random.normal(k[0], (N, Cin, H, W), jnp.float32)
    g1 = jax.random.uniform(k[1], (Cin,), jnp.float32, 0.5, 1.5)
    b1 = 0.1 * jax.random.normal(k[2], (Cin,), jnp.float32)
    w1 = jax.random.normal(k[3], (Cmid, Cin, 1, 1), jnp.float32) / jnp.sqrt(Cin)
    g2 = jax.random.uniform(k[4], (Cmid,), jnp.float32, 0.5, 1.5)
    b2 = 0.1 * jax.random.normal(k[5], (Cmid,), jnp.float32)
    w2 = jax.random.normal(k[6], (growth_rate, Cmid, 3, 3), jnp.float32) / jnp.sqrt(9 * Cmid)
    params = (g1, b1, w1, g2, b2, w2)

    out = jax.block_until_ready(bottleneck_forward(x, params))
    ref = jax.block_until_ready(_reference(x, params))

    assert out.shape == (N, Cin + growth_rate, H, W), out.shape
    assert out.dtype == jnp.float32
    # Shortcut channels must be bit-exact copies of x.
    assert bool(jnp.array_equal(out[:, :Cin], x))
    # Residual channels: tolerance covers bf16 MXU operands + bf16 y intermediate.
    max_err = float(jnp.max(jnp.abs(out - ref)))
    assert jnp.allclose(out, ref, atol=2e-2, rtol=2e-2), max_err

    print("KERNEL_OK")
</pallas_src>

<mosaic_0001>
module attributes {stable_mosaic.version = 11 : i64} {
  func.func @_channel_stats_kernel(%arg0: i32, %arg1: memref<2x4x256xf32, #tpu.memory_space<vmem>>, %arg2: memref<4x2xf32, #tpu.memory_space<vmem>>) attributes {dimension_semantics = [#tpu.dimension_semantics<arbitrary>], iteration_bounds = array<i64: 1>, scalar_prefetch = 0 : i64, scratch_operands = 0 : i64, tpu.core_type = #tpu.core_type<tc>, window_params = [{transform_indices = @transform_0, window_bounds = array<i64: 2, 4, 256>}, {pipeline_mode = #tpu.pipeline_mode<synchronous>, transform_indices = @transform_1, window_bounds = array<i64: 4, 2>}]} {
    %c0_i32 = arith.constant 0 : i32
    %0 = arith.cmpi eq, %arg0, %c0_i32 : i32
    %1 = arith.extui %0 : i1 to i32
    %c0_i32_0 = arith.constant 0 : i32
    %2 = arith.cmpi ne, %1, %c0_i32_0 : i32
    scf.if %2 {
      %cst_14 = arith.constant 0.000000e+00 : f32
      %27 = vector.broadcast %cst_14 : f32 to vector<4x2xf32>
      %c0_15 = arith.constant 0 : index
      %c0_16 = arith.constant 0 : index
      %28 = vector.load %arg2[%c0_15, %c0_16] : memref<4x2xf32, #tpu.memory_space<vmem>>, vector<4x2xf32>
      tpu.vector_store %arg2[%c0_15, %c0_16], %27 {strides = array<i32>} : memref<4x2xf32, #tpu.memory_space<vmem>>, vector<4x2xf32>,
    } else {
    }
    %cst = arith.constant 0.000000e+00 : f32
    %3 = vector.broadcast %cst : f32 to vector<4x1xf32>
    %cst_1 = arith.constant 0.000000e+00 : f32
    %4 = vector.broadcast %cst_1 : f32 to vector<4x1xf32>
    %c0 = arith.constant 0 : index
    %c0_2 = arith.constant 0 : index
    %c0_3 = arith.constant 0 : index
    %5 = vector.load %arg1[%c0, %c0_2, %c0_3] : memref<2x4x256xf32, #tpu.memory_space<vmem>>, vector<1x4x256xf32>
    %6 = vector.shape_cast %5 : vector<1x4x256xf32> to vector<4x256xf32>
    %cst_4 = arith.constant dense<0.000000e+00> : vector<4xf32>
    %7 = vector.multi_reduction <add>, %6, %cst_4 [1] : vector<4x256xf32> to vector<4xf32>
    %8 = vector.shape_cast %7 : vector<4xf32> to vector<4x1xf32>
    %9 = arith.addf %3, %8 : vector<4x1xf32>
    %10 = arith.mulf %6, %6 : vector<4x256xf32>
    %cst_5 = arith.constant dense<0.000000e+00> : vector<4xf32>
    %11 = vector.multi_reduction <add>, %10, %cst_5 [1] : vector<4x256xf32> to vector<4xf32>
    %12 = vector.shape_cast %11 : vector<4xf32> to vector<4x1xf32>
    %13 = arith.addf %4, %12 : vector<4x1xf32>
    %c1 = arith.constant 1 : index
    %c0_6 = arith.constant 0 : index
    %c0_7 = arith.constant 0 : index
    %14 = vector.load %arg1[%c1, %c0_6, %c0_7] : memref<2x4x256xf32, #tpu.memory_space<vmem>>, vector<1x4x256xf32>
    %15 = vector.shape_cast %14 : vector<1x4x256xf32> to vector<4x256xf32>
    %cst_8 = arith.constant dense<0.000000e+00> : vector<4xf32>
    %16 = vector.multi_reduction <add>, %15, %cst_8 [1] : vector<4x256xf32> to vector<4xf32>
    %17 = vector.shape_cast %16 : vector<4xf32> to vector<4x1xf32>
    %18 = arith.addf %9, %17 : vector<4x1xf32>
    %19 = arith.mulf %15, %15 : vector<4x256xf32>
    %cst_9 = arith.constant dense<0.000000e+00> : vector<4xf32>
    %20 = vector.multi_reduction <add>, %19, %cst_9 [1] : vector<4x256xf32> to vector<4xf32>
    %21 = vector.shape_cast %20 : vector<4xf32> to vector<4x1xf32>
    %22 = arith.addf %13, %21 : vector<4x1xf32>
    %c0_10 = arith.constant 0 : index
    %c0_11 = arith.constant 0 : index
    %23 = vector.load %arg2[%c0_10, %c0_11] : memref<4x2xf32, #tpu.memory_space<vmem>>, vector<4x2xf32>
    %24 = tpu.concatenate %18, %22 in 1 : vector<4x1xf32>, vector<4x1xf32> -> vector<4x2xf32>
    %25 = arith.addf %23, %24 : vector<4x2xf32>
    %c0_12 = arith.constant 0 : index
    %c0_13 = arith.constant 0 : index
    %26 = vector.load %arg2[%c0_12, %c0_13] : memref<4x2xf32, #tpu.memory_space<vmem>>, vector<4x2xf32>
    tpu.vector_store %arg2[%c0_12, %c0_13], %25 {strides = array<i32>} : memref<4x2xf32, #tpu.memory_space<vmem>>, vector<4x2xf32>,
    return
  }
  func.func @transform_0(%arg0: i32) -> (i32, i32, i32) {
    %c0_i32 = arith.constant 0 : i32
    %c0_i32_0 = arith.constant 0 : i32
    %c0_i32_1 = arith.constant 0 : i32
    return %arg0, %c0_i32, %c0_i32_0 : i32, i32, i32
  }
  func.func @transform_1(%arg0: i32) -> (i32, i32) {
    %c0_i32 = arith.constant 0 : i32
    %c0_i32_0 = arith.constant 0 : i32
    %c0_i32_1 = arith.constant 0 : i32
    return %c0_i32, %c0_i32_0 : i32, i32
  }
}

</mosaic_0001>

<llo_original>
// kernel: tpu_custom_call.1
$region0: #{tpu_custom_call.1}
  #allocation0 [shape = 'u32[]', space=smem, size = 0x4, offset = 0x4, fixed_abs, tag = 'smem constant byte address 0x4 - core index']
  #allocation1 [shape = 'u32[72,128]{1,0:T(1,128)}', space=vmem, size = 0x9000, scoped, tag = 'internal scratch']
  %s0 = inlined_call_operand.hbm [shape: f32[2,4,256], index: 0, kind: input, shape index: {}]
  %s1 = inlined_call_operand.vmem [shape: f32[4,2], index: 1, kind: output, shape index: {}]
  %s2 = sld [smem:[#allocation0]]
  $region22: #{tpu_custom_call.1} parent=0
    _
  %s4 = ssub.s32 1, %s2
  %s5 = scalar_select 0, %s4, %s2
  $region1: #{tpu_custom_call.1} parent=0
    #allocation2 [shape = 'u8[8192]{0}', space=vmem, size = 0x2000, scoped, tag = 'input window, operand 0, single buffered']
    #allocation3 [shape = 's32[1]{0}', space=sflag, size = 0x4, scoped, tag = 'scoped memory for tpu_custom_call.1']
    %6 = vsyncpa [#allocation3], 0
    // Predicated region
    $region2: #{tpu_custom_call.1} parent=1 // pred_check
      _
    $region3: #{tpu_custom_call.1} parent=1 // pred_check_branch
      %8 = sbr.rel (0) target = $region5
    $region4: #{tpu_custom_call.1} parent=1 // pred_region
      %10 = vsyncadd [#allocation3], 0
      %s11 = sshll.u32 %s0, 4
      %s12 = int_to_ptr.hbm [resolvable:$true] %s11
      %s13 = sshll.u32 [#allocation2], 4
      %s14 = int_to_ptr.vmem [resolvable:$true] %s13
      %19 = dma.hbm_to_vmem [thread:$0]  %s12, 256, %s14, [#allocation3], 128, 128, 8
    $region5: #{tpu_custom_call.1} parent=1 // pred_fallthru
      _
    // Predicated region
    $region6: #{tpu_custom_call.1} parent=1 // pred_check
      _
    $region7: #{tpu_custom_call.1} parent=1 // pred_check_branch
      %21 = sbr.rel (0) target = $region9
    $region8: #{tpu_custom_call.1} parent=1 // pred_region
      %23 = dma.done [#allocation3], 256
    $region9: #{tpu_custom_call.1} parent=1 // pred_fallthru
      _
    %p24 = scmp.eq.s32.totalorder 0, 0
    // Predicated region
    $region10: #{tpu_custom_call.1} parent=1 // pred_check
      %p25 = pneg %p24
    $region11: #{tpu_custom_call.1} parent=1 // pred_check_branch
      %27 = sbr.rel (%p25) target = $region13
    $region12: #{tpu_custom_call.1} parent=1 // pred_region
      %vm28 = vcmask 11264
      %29 = vst.msk [vmem:[%s1] sm:$0xf] %vm28, 0.0
    $region13: #{tpu_custom_call.1} parent=1 // pred_fallthru
      _
    %v30 = vld [vmem:[#allocation2] sm:$0xff]
    %32 = vst [vmem:[#allocation1] ss:$2 sm:$0xff] %v30
    %v33 = vld.sshfl [vmem:[#allocation1] sm:$0xff pattern:$0x75316420]
    %v34 = vld.sshfl [vmem:[#allocation1 + $0x8] sm:$0xff pattern:$0x75316420]
    %vm37 = vcmask 1043456
    %v38 = vsel %vm37, %v33, 0.0
    %v39 = vsel %vm37, %v34, 0.0
    %v40 = vadd.f32 %v38, %v39
    %41 = vadd.xlane.f32.xlu0 %v40
    %v42 = vpop.xlane.xlu0 %41
    %v43 = vadd.f32 %v42, 0.0
    %v44 = vmul.f32 %v30, %v30
    %46 = vst [vmem:[#allocation1] ss:$2 sm:$0xff] %v44
    %v47 = vld.sshfl [vmem:[#allocation1] sm:$0xff pattern:$0x75316420]
    %v48 = vld.sshfl [vmem:[#allocation1 + $0x8] sm:$0xff pattern:$0x75316420]
    %v51 = vsel %vm37, %v47, 0.0
    %v52 = vsel %vm37, %v48, 0.0
    %v53 = vadd.f32 %v51, %v52
    %54 = vadd.xlane.f32.xlu0 %v53
    %v55 = vpop.xlane.xlu0 %54
    %v56 = vadd.f32 %v55, 0.0
    %s57 = scalar_lea.vmem [#allocation2], 8
    %v58 = vld [vmem:[%s57] sm:$0xff]
    %60 = vst [vmem:[#allocation1] ss:$2 sm:$0xff] %v58
    %v61 = vld.sshfl [vmem:[#allocation1] sm:$0xff pattern:$0x75316420]
    %v62 = vld.sshfl [vmem:[#allocation1 + $0x8] sm:$0xff pattern:$0x75316420]
    %v65 = vsel %vm37, %v61, 0.0
    %v66 = vsel %vm37, %v62, 0.0
    %v67 = vadd.f32 %v65, %v66
    %68 = vadd.xlane.f32.xlu0 %v67
    %v69 = vpop.xlane.xlu0 %68
    %v70 = vadd.f32 %v43, %v69
    %v71 = vmul.f32 %v58, %v58
    %73 = vst [vmem:[#allocation1] ss:$2 sm:$0xff] %v71
    %v74 = vld.sshfl [vmem:[#allocation1] sm:$0xff pattern:$0x75316420]
    %v75 = vld.sshfl [vmem:[#allocation1 + $0x8] sm:$0xff pattern:$0x75316420]
    %v78 = vsel %vm37, %v74, 0.0
    %v79 = vsel %vm37, %v75, 0.0
    %v80 = vadd.f32 %v78, %v79
    %81 = vadd.xlane.f32.xlu0 %v80
    %v82 = vpop.xlane.xlu0 %81
    %v83 = vadd.f32 %v56, %v82
    %v84 = vld [vmem:[%s1] sm:$0xf]
    %vm85 = vcmask 7168
    %v86 = vsel %vm85, %v70, %v83
    %v87 = vadd.f32 %v84, %v86
    %vm88 = vcmask 11264
    %89 = vst.msk [vmem:[%s1] sm:$0xf] %vm88, %v87
    // Predicated region
    $region14: #{tpu_custom_call.1} parent=1 // pred_check
      _
    $region15: #{tpu_custom_call.1} parent=1 // pred_check_branch
      %91 = sbr.rel (0) target = $region17
    $region16: #{tpu_custom_call.1} parent=1 // pred_region
      _
    $region17: #{tpu_custom_call.1} parent=1 // pred_fallthru
      _
    // Predicated region
    $region18: #{tpu_custom_call.1} parent=1 // pred_check
      _
    $region19: #{tpu_custom_call.1} parent=1 // pred_check_branch
      %93 = sbr.rel (0) target = $region21
    $region20: #{tpu_custom_call.1} parent=1 // pred_region
      _
    $region21: #{tpu_custom_call.1} parent=1 // pred_fallthru
      _
    %94 = vsyncpa [#allocation3], 1

</llo_original>
